<compile_context>
chip_gen: v5e
topology: v5e:2x2
jax: 0.10.0
libtpu: 0.0.40
codegen_flags: <defaults>
</compile_context>

<pallas_src>
import functools

import jax
import jax.numpy as jnp
from jax.experimental import pallas as pl
from jax.experimental.pallas import tpu as pltpu

LANE = 128
SUBLANE = 8


def _cdiv(a, b):
    return -(-a // b)


def _round_up(a, b):
    return _cdiv(a, b) * b


def _device_kind():
    try:
        return jax.devices()[0].device_kind.lower()
    except Exception:
        return ""


def _vmem_capacity_bytes():
    try:
        return int(pltpu.get_tpu_info().vmem_capacity_bytes)
    except Exception:
        return 64 << 20  # conservative: v7x per-TC VMEM


def _dice_partial_kernel(x_ref, t_ref, inter_ref, denom_ref, *,
                         rows_total, tile_r, tiles_per_split,
                         num_full_tiles, need_mask):
    """Accumulate per-sample lane partials of sum(x*t) and sum(x+t).

    Grid: (batch_block, split, tile). Outputs are (1, nb, 128) blocks resident
    across the tile (reduction) axis — accumulator-in-output, no scratch.
    """
    s = pl.program_id(1)
    j = pl.program_id(2)

    @pl.when(j == 0)
    def _():
        inter_ref[...] = jnp.zeros_like(inter_ref)
        denom_ref[...] = jnp.zeros_like(denom_ref)

    x = x_ref[...].astype(jnp.float32)   # (nb, tile_r, 128)
    t = t_ref[...].astype(jnp.float32)

    def accumulate(xv, tv):
        # Reduce over the row (sublane) axis only -> (nb, 128) lane partials;
        # the single cross-lane reduce happens once, in plain JAX.
        inter_ref[...] += jnp.sum(xv * tv, axis=1)[None]
        denom_ref[...] += jnp.sum(xv + tv, axis=1)[None]

    if not need_mask:
        # Fast path: every tile is fully in-bounds.
        accumulate(x, t)
    else:
        tile = s * tiles_per_split + j          # logical (unclamped) tile index
        is_edge = tile >= num_full_tiles        # ragged or padding tile

        @pl.when(jnp.logical_not(is_edge))
        def _():
            accumulate(x, t)                    # unmasked interior fast path

        @pl.when(is_edge)
        def _():
            # Row-only mask (1, tile_r, 1); broadcasts over batch and lanes.
            row = (tile * tile_r
                   + jax.lax.broadcasted_iota(jnp.int32, (1, tile_r, 1), 1))
            valid = row < rows_total
            accumulate(jnp.where(valid, x, 0.0), jnp.where(valid, t, 0.0))


def dice_loss(inp, target, *, smooth=1.0,
              target_block_bytes=None, vmem_limit_bytes=None,
              n_splits=None, max_batch_block=8):
    """JAX/Pallas equivalent of DiceLoss.forward(input, target)."""
    assert inp.shape == target.shape
    n = inp.shape[0]
    x = inp.reshape(n, -1)
    t = target.reshape(n, -1)
    d = x.shape[1]

    # ---- generation-aware defaults ------------------------------------------
    kind = _device_kind()
    is_v7 = ("v7" in kind) or ("7x" in kind)
    vmem_cap = _vmem_capacity_bytes()
    if vmem_limit_bytes is None:
        # Leave headroom under the physical VMEM of every generation
        # (v5e/v6e: 128 MiB -> ~80 MiB; v7x: 64 MiB -> ~44 MiB).
        vmem_limit_bytes = min(int(0.7 * vmem_cap), 80 << 20)
    if target_block_bytes is None:
        # 2 inputs x 2 pipeline buffers per step + accumulators/slack.
        target_block_bytes = max(1 << 20, vmem_limit_bytes // 6)
    if n_splits is None:
        # Only v7x has 2 TensorCores per chip; on 1-TC chips the split is a
        # serial loop that only adds padding-tile risk.
        n_splits = 2 if is_v7 else 1
        # TODO(synk): on v7x, verify via xprof that the "parallel" split axis
        # really shards across both TCs; otherwise switch to CORE_PARALLEL.

    # ---- lane-align D, view as (N, R, 128) -----------------------------------
    d_pad = _round_up(d, LANE)
    if d_pad != d:
        # TODO(synk): for D % 128 != 0 this materializes padded copies (one
        # extra HBM pass); a lane-masked tail block would avoid it.  Typical
        # segmentation shapes have C*H*W % 128 == 0 so this is a free reshape.
        x = jnp.pad(x, ((0, 0), (0, d_pad - d)))
        t = jnp.pad(t, ((0, 0), (0, d_pad - d)))
    r = d_pad // LANE
    x = x.reshape(n, r, LANE)
    t = t.reshape(n, r, LANE)

    # ---- batch blocking (keeps per-DMA segments large for big N) -------------
    nb = n if n <= max_batch_block else max_batch_block
    n_batch_blocks = _cdiv(n, nb)

    # ---- row-tile sizing ------------------------------------------------------
    itemsize = max(x.dtype.itemsize, t.dtype.itemsize)
    tile_r = max(SUBLANE, target_block_bytes // (nb * LANE * itemsize))
    tile_r -= tile_r % SUBLANE
    if tile_r >= r:
        tile_r = r                       # single full-extent row block
    num_tiles = _cdiv(r, tile_r)

    if num_tiles >= 2 and n_splits > 1:
        if num_tiles % n_splits != 0:
            # Try to avoid a padding tile: shrink tile_r a little (multiple of
            # 8, shrink-only so VMEM budget still holds) until the tile count
            # divides evenly across the splits.
            for extra in range(1, 4):
                cand = _round_up(_cdiv(r, num_tiles + extra), SUBLANE)
                cand = min(cand, tile_r)
                if cand >= SUBLANE and _cdiv(r, cand) % n_splits == 0:
                    tile_r = cand
                    num_tiles = _cdiv(r, cand)
                    break
    else:
        n_splits = 1                     # a second split would be pure padding

    tiles_per_split = _cdiv(num_tiles, n_splits)
    num_full_tiles = r // tile_r                         # tiles with no OOB rows
    has_padding_tiles = n_splits * tiles_per_split > num_tiles
    need_mask = (n_splits * tiles_per_split) > num_full_tiles

    def in_map(b, s, j):
        tile = s * tiles_per_split + j
        if has_padding_tiles:
            # Clamp logical padding tiles to a legal block; the in-kernel
            # masked branch zeroes their contribution.
            tile = jnp.minimum(tile, num_tiles - 1)
        return (b, tile, 0)

    def out_map(b, s, j):
        return (s, b, 0)

    kernel = functools.partial(
        _dice_partial_kernel,
        rows_total=r, tile_r=tile_r, tiles_per_split=tiles_per_split,
        num_full_tiles=num_full_tiles, need_mask=need_mask)

    inter_parts, denom_parts = pl.pallas_call(
        kernel,
        out_shape=(jax.ShapeDtypeStruct((n_splits, n, LANE), jnp.float32),
                   jax.ShapeDtypeStruct((n_splits, n, LANE), jnp.float32)),
        grid_spec=pltpu.PrefetchScalarGridSpec(
            num_scalar_prefetch=0,
            grid=(n_batch_blocks, n_splits, tiles_per_split),
            in_specs=[
                pl.BlockSpec((nb, tile_r, LANE), in_map),
                pl.BlockSpec((nb, tile_r, LANE), in_map),
            ],
            out_specs=[
                pl.BlockSpec((1, nb, LANE), out_map),
                pl.BlockSpec((1, nb, LANE), out_map),
            ],
        ),
        compiler_params=pltpu.CompilerParams(
            dimension_semantics=("parallel", "parallel", "arbitrary"),
            vmem_limit_bytes=vmem_limit_bytes),
    )(x, t)

    # Tiny epilogue in plain JAX: one cross-lane / cross-split reduce and the
    # dice formula on (n_splits, N, 128) partials.
    inter = jnp.sum(inter_parts, axis=(0, 2))    # (N,)
    denom = jnp.sum(denom_parts, axis=(0, 2))    # (N,)
    per_sample = 2.0 * (inter + smooth) / (denom + smooth)
    return 1.0 - jnp.sum(per_sample) / n


def _dice_loss_ref(inp, target):
    """Pure-JAX reference matching the PyTorch forward exactly."""
    n = inp.shape[0]
    smooth = 1.0
    x = inp.reshape(n, -1).astype(jnp.float32)
    t = target.reshape(n, -1).astype(jnp.float32)
    inter = jnp.sum(x * t, axis=1)
    loss = 2.0 * (inter + smooth) / (jnp.sum(x, axis=1) + jnp.sum(t, axis=1) + smooth)
    return 1.0 - jnp.sum(loss) / n


if __name__ == "__main__":
    key = jax.random.PRNGKey(0)
    k1, k2, k3, k4, k5, k6 = jax.random.split(key, 6)

    # Test 1: canonical N, C, H, W segmentation-style shape (fast path, no mask).
    shape = (2, 4, 16, 16)
    pred = jax.nn.sigmoid(jax.random.normal(k1, shape, dtype=jnp.float32))
    targ = (jax.random.uniform(k2, shape) > 0.5).astype(jnp.float32)
    loss = jax.block_until_ready(dice_loss(pred, targ))
    ref = _dice_loss_ref(pred, targ)
    assert jnp.allclose(loss, ref, atol=1e-5, rtol=1e-5), (loss, ref)

    # Test 2: forced tiny blocks + forced 2-way split to exercise the tiled /
    # ragged-tile / padding-tile masked edge path (R=20 rows, tile_r=8).
    shape2 = (2, 4, 32, 20)
    pred2 = jax.nn.sigmoid(jax.random.normal(k3, shape2, dtype=jnp.float32))
    targ2 = (jax.random.uniform(k4, shape2) > 0.5).astype(jnp.float32)
    loss2 = jax.block_until_ready(
        dice_loss(pred2, targ2, target_block_bytes=8 * 1024, n_splits=2))
    ref2 = _dice_loss_ref(pred2, targ2)
    assert jnp.allclose(loss2, ref2, atol=1e-5, rtol=1e-5), (loss2, ref2)

    # Test 3: larger batch to exercise the batch grid axis (nb=8, 2 blocks).
    shape3 = (16, 4, 16, 16)
    pred3 = jax.nn.sigmoid(jax.random.normal(k5, shape3, dtype=jnp.float32))
    targ3 = (jax.random.uniform(k6, shape3) > 0.5).astype(jnp.float32)
    loss3 = jax.block_until_ready(dice_loss(pred3, targ3, max_batch_block=8))
    ref3 = _dice_loss_ref(pred3, targ3)
    assert jnp.allclose(loss3, ref3, atol=1e-5, rtol=1e-5), (loss3, ref3)

    print("KERNEL_OK")
</pallas_src>

<mosaic_0001>
module attributes {stable_mosaic.version = 11 : i64} {
  func.func @_dice_partial_kernel(%arg0: i32, %arg1: i32, %arg2: i32, %arg3: memref<2x8x128xf32, #tpu.memory_space<vmem>>, %arg4: memref<2x8x128xf32, #tpu.memory_space<vmem>>, %arg5: memref<1x2x128xf32, #tpu.memory_space<vmem>>, %arg6: memref<1x2x128xf32, #tpu.memory_space<vmem>>) attributes {dimension_semantics = [#tpu.dimension_semantics<parallel>, #tpu.dimension_semantics<parallel>, #tpu.dimension_semantics<arbitrary>], iteration_bounds = array<i64: 1, 1, 1>, scalar_prefetch = 0 : i64, scratch_operands = 0 : i64, tpu.core_type = #tpu.core_type<tc>, window_params = [{transform_indices = @transform_0, window_bounds = array<i64: 2, 8, 128>}, {transform_indices = @transform_1, window_bounds = array<i64: 2, 8, 128>}, {transform_indices = @transform_2, window_bounds = array<i64: 1, 2, 128>}, {transform_indices = @transform_3, window_bounds = array<i64: 1, 2, 128>}]} {
    %c0_i32 = arith.constant 0 : i32
    %0 = arith.cmpi eq, %arg2, %c0_i32 : i32
    %1 = arith.extui %0 : i1 to i32
    %c0_i32_0 = arith.constant 0 : i32
    %2 = arith.cmpi ne, %1, %c0_i32_0 : i32
    scf.if %2 {
      %cst_19 = arith.constant 0.000000e+00 : f32
      %17 = vector.broadcast %cst_19 : f32 to vector<1x2x128xf32>
      %c0_20 = arith.constant 0 : index
      %c0_21 = arith.constant 0 : index
      %c0_22 = arith.constant 0 : index
      %18 = vector.load %arg5[%c0_20, %c0_21, %c0_22] : memref<1x2x128xf32, #tpu.memory_space<vmem>>, vector<1x2x128xf32>
      tpu.vector_store %arg5[%c0_20, %c0_21, %c0_22], %17 {strides = array<i32>} : memref<1x2x128xf32, #tpu.memory_space<vmem>>, vector<1x2x128xf32>,
      %cst_23 = arith.constant 0.000000e+00 : f32
      %19 = vector.broadcast %cst_23 : f32 to vector<1x2x128xf32>
      %c0_24 = arith.constant 0 : index
      %c0_25 = arith.constant 0 : index
      %c0_26 = arith.constant 0 : index
      %20 = vector.load %arg6[%c0_24, %c0_25, %c0_26] : memref<1x2x128xf32, #tpu.memory_space<vmem>>, vector<1x2x128xf32>
      tpu.vector_store %arg6[%c0_24, %c0_25, %c0_26], %19 {strides = array<i32>} : memref<1x2x128xf32, #tpu.memory_space<vmem>>, vector<1x2x128xf32>,
    } else {
    }
    %c0 = arith.constant 0 : index
    %c0_1 = arith.constant 0 : index
    %c0_2 = arith.constant 0 : index
    %3 = vector.load %arg3[%c0, %c0_1, %c0_2] : memref<2x8x128xf32, #tpu.memory_space<vmem>>, vector<2x8x128xf32>
    %c0_3 = arith.constant 0 : index
    %c0_4 = arith.constant 0 : index
    %c0_5 = arith.constant 0 : index
    %4 = vector.load %arg4[%c0_3, %c0_4, %c0_5] : memref<2x8x128xf32, #tpu.memory_space<vmem>>, vector<2x8x128xf32>
    %c0_6 = arith.constant 0 : index
    %c0_7 = arith.constant 0 : index
    %c0_8 = arith.constant 0 : index
    %5 = vector.load %arg5[%c0_6, %c0_7, %c0_8] : memref<1x2x128xf32, #tpu.memory_space<vmem>>, vector<1x2x128xf32>
    %6 = arith.mulf %3, %4 : vector<2x8x128xf32>
    %cst = arith.constant dense<0.000000e+00> : vector<2x128xf32>
    %7 = vector.multi_reduction <add>, %6, %cst [1] : vector<2x8x128xf32> to vector<2x128xf32>
    %8 = vector.shape_cast %7 : vector<2x128xf32> to vector<1x2x128xf32>
    %9 = arith.addf %5, %8 : vector<1x2x128xf32>
    %c0_9 = arith.constant 0 : index
    %c0_10 = arith.constant 0 : index
    %c0_11 = arith.constant 0 : index
    %10 = vector.load %arg5[%c0_9, %c0_10, %c0_11] : memref<1x2x128xf32, #tpu.memory_space<vmem>>, vector<1x2x128xf32>
    tpu.vector_store %arg5[%c0_9, %c0_10, %c0_11], %9 {strides = array<i32>} : memref<1x2x128xf32, #tpu.memory_space<vmem>>, vector<1x2x128xf32>,
    %c0_12 = arith.constant 0 : index
    %c0_13 = arith.constant 0 : index
    %c0_14 = arith.constant 0 : index
    %11 = vector.load %arg6[%c0_12, %c0_13, %c0_14] : memref<1x2x128xf32, #tpu.memory_space<vmem>>, vector<1x2x128xf32>
    %12 = arith.addf %3, %4 : vector<2x8x128xf32>
    %cst_15 = arith.constant dense<0.000000e+00> : vector<2x128xf32>
    %13 = vector.multi_reduction <add>, %12, %cst_15 [1] : vector<2x8x128xf32> to vector<2x128xf32>
    %14 = vector.shape_cast %13 : vector<2x128xf32> to vector<1x2x128xf32>
    %15 = arith.addf %11, %14 : vector<1x2x128xf32>
    %c0_16 = arith.constant 0 : index
    %c0_17 = arith.constant 0 : index
    %c0_18 = arith.constant 0 : index
    %16 = vector.load %arg6[%c0_16, %c0_17, %c0_18] : memref<1x2x128xf32, #tpu.memory_space<vmem>>, vector<1x2x128xf32>
    tpu.vector_store %arg6[%c0_16, %c0_17, %c0_18], %15 {strides = array<i32>} : memref<1x2x128xf32, #tpu.memory_space<vmem>>, vector<1x2x128xf32>,
    return
  }
  func.func @transform_0(%arg0: i32, %arg1: i32, %arg2: i32) -> (i32, i32, i32) {
    %c1_i32 = arith.constant 1 : i32
    %0 = arith.muli %arg1, %c1_i32 : i32
    %1 = arith.addi %0, %arg2 : i32
    %c0_i32 = arith.constant 0 : i32
    %c0_i32_0 = arith.constant 0 : i32
    return %arg0, %1, %c0_i32 : i32, i32, i32
  }
  func.func @transform_1(%arg0: i32, %arg1: i32, %arg2: i32) -> (i32, i32, i32) {
    %c1_i32 = arith.constant 1 : i32
    %0 = arith.muli %arg1, %c1_i32 : i32
    %1 = arith.addi %0, %arg2 : i32
    %c0_i32 = arith.constant 0 : i32
    %c0_i32_0 = arith.constant 0 : i32
    return %arg0, %1, %c0_i32 : i32, i32, i32
  }
  func.func @transform_2(%arg0: i32, %arg1: i32, %arg2: i32) -> (i32, i32, i32) {
    %c0_i32 = arith.constant 0 : i32
    %c0_i32_0 = arith.constant 0 : i32
    return %arg1, %arg0, %c0_i32 : i32, i32, i32
  }
  func.func @transform_3(%arg0: i32, %arg1: i32, %arg2: i32) -> (i32, i32, i32) {
    %c0_i32 = arith.constant 0 : i32
    %c0_i32_0 = arith.constant 0 : i32
    return %arg1, %arg0, %c0_i32 : i32, i32, i32
  }
}

</mosaic_0001>

<llo_original>
// kernel: tpu_custom_call.1
$region0: #{tpu_custom_call.1}
  #allocation0 [shape = 'u32[]', space=smem, size = 0x4, offset = 0x4, fixed_abs, tag = 'smem constant byte address 0x4 - core index']
  #allocation1 [shape = 'u32[72,128]{1,0:T(1,128)}', space=vmem, size = 0x9000, scoped, tag = 'internal scratch']
  %s0 = inlined_call_operand.hbm [shape: f32[2,8,128], index: 0, kind: input, shape index: {}]
  %s1 = inlined_call_operand.hbm [shape: f32[2,8,128], index: 1, kind: input, shape index: {}]
  %s2 = inlined_call_operand.hbm [shape: f32[1,2,128], index: 2, kind: output, shape index: {0}]
  %s3 = inlined_call_operand.hbm [shape: f32[1,2,128], index: 3, kind: output, shape index: {1}]
  %4 = xla_tuple %s2, %s3
  %s5 = sld [smem:[#allocation0]]
  $region38: #{tpu_custom_call.1} parent=0
    _
  %s7 = ssub.s32 1, %s5
  %s8 = scalar_select 0, %s7, %s5
  $region1: #{tpu_custom_call.1} parent=0
    #allocation2 [shape = 'u8[8192]{0}', space=vmem, size = 0x2000, scoped, tag = 'input window, operand 0, single buffered']
    #allocation3 [shape = 's32[1]{0}', space=sflag, size = 0x4, scoped, tag = 'scoped memory for tpu_custom_call.1']
    #allocation4 [shape = 's32[1]{0}', space=sflag, size = 0x4, scoped, tag = 'scoped memory for tpu_custom_call.1']
    #allocation5 [shape = 'u8[8192]{0}', space=vmem, size = 0x2000, scoped, tag = 'input window, operand 1, single buffered']
    #allocation6 [shape = 's32[1]{0}', space=sflag, size = 0x4, scoped, tag = 'scoped memory for tpu_custom_call.1']
    #allocation7 [shape = 'u8[1024]{0}', space=vmem, size = 0x400, scoped, tag = 'output window, operand 0, single buffered']
    #allocation8 [shape = 'u8[1024]{0}', space=vmem, size = 0x400, scoped, tag = 'output window, operand 1, single buffered']
    #allocation9 [shape = 's32[1]{0}', space=sflag, size = 0x4, scoped, tag = 'scoped memory for tpu_custom_call.1']
    %9 = vsyncpa [#allocation3], 0
    %10 = vsyncpa [#allocation6], 0
    %11 = vsyncpa [#allocation4], 0
    %12 = vsyncpa [#allocation9], 0
    // Predicated region
    $region2: #{tpu_custom_call.1} parent=1 // pred_check
      _
    $region3: #{tpu_custom_call.1} parent=1 // pred_check_branch
      %14 = sbr.rel (0) target = $region5
    $region4: #{tpu_custom_call.1} parent=1 // pred_region
      %s15 = sadd.s32 0, 0
      %17 = vsyncadd [#allocation3], 0
      %s18 = smul.addr %s15, 8
      %s19 = scalar_lea.hbm %s0, %s18
      %s20 = sshll.u32 %s19, 4
      %s21 = int_to_ptr.hbm [resolvable:$true] %s20
      %s22 = sshll.u32 [#allocation2], 4
      %s23 = int_to_ptr.vmem [resolvable:$true] %s22
      %28 = dma.hbm_to_vmem [thread:$0]  %s21, 256, %s23, [#allocation3], 128, 128, 8
    $region5: #{tpu_custom_call.1} parent=1 // pred_fallthru
      _
    // Predicated region
    $region6: #{tpu_custom_call.1} parent=1 // pred_check
      _
    $region7: #{tpu_custom_call.1} parent=1 // pred_check_branch
      %30 = sbr.rel (0) target = $region9
    $region8: #{tpu_custom_call.1} parent=1 // pred_region
      %s31 = sadd.s32 0, 0
      %33 = vsyncadd [#allocation6], 0
      %s34 = smul.addr %s31, 8
      %s35 = scalar_lea.hbm %s1, %s34
      %s36 = sshll.u32 %s35, 4
      %s37 = int_to_ptr.hbm [resolvable:$true] %s36
      %s38 = sshll.u32 [#allocation5], 4
      %s39 = int_to_ptr.vmem [resolvable:$true] %s38
      %44 = dma.hbm_to_vmem [thread:$0]  %s37, 256, %s39, [#allocation6], 128, 128, 8
    $region9: #{tpu_custom_call.1} parent=1 // pred_fallthru
      _
    // Predicated region
    $region10: #{tpu_custom_call.1} parent=1 // pred_check
      _
    $region11: #{tpu_custom_call.1} parent=1 // pred_check_branch
      %46 = sbr.rel (0) target = $region13
    $region12: #{tpu_custom_call.1} parent=1 // pred_region
      %48 = dma.done [#allocation3], 256
    $region13: #{tpu_custom_call.1} parent=1 // pred_fallthru
      _
    // Predicated region
    $region14: #{tpu_custom_call.1} parent=1 // pred_check
      _
    $region15: #{tpu_custom_call.1} parent=1 // pred_check_branch
      %50 = sbr.rel (0) target = $region17
    $region16: #{tpu_custom_call.1} parent=1 // pred_region
      %52 = dma.done [#allocation6], 256
    $region17: #{tpu_custom_call.1} parent=1 // pred_fallthru
      _
    %s53 = sadd.s32 0, 0
    %s54 = sadd.s32 0, 0
    %p55 = scmp.eq.s32.totalorder 0, 0
    // Predicated region
    $region18: #{tpu_custom_call.1} parent=1 // pred_check
      %p56 = pneg %p55
    $region19: #{tpu_custom_call.1} parent=1 // pred_check_branch
      %58 = sbr.rel (%p56) target = $region21
    $region20: #{tpu_custom_call.1} parent=1 // pred_region
      %59 = vst [vmem:[#allocation7] sm:$0x3] 0.0
      %60 = vst [vmem:[#allocation8] sm:$0x3] 0.0
    $region21: #{tpu_custom_call.1} parent=1 // pred_fallthru
      _
    %v61 = vld [vmem:[#allocation2] sm:$0xff]
    %v62 = vld [vmem:[#allocation2 + $0x8] sm:$0xff]
    %v63 = vld [vmem:[#allocation5] sm:$0xff]
    %v64 = vld [vmem:[#allocation5 + $0x8] sm:$0xff]
    %v65 = vld [vmem:[#allocation7] sm:$0x3]
    %v66 = vmul.f32 %v61, %v63
    %v67 = vmul.f32 %v62, %v64
    %v68 = vrot.slane %v66, 4
    %v69 = vadd.f32 %v66, %v68
    %v70 = vrot.slane %v69, 2
    %v71 = vadd.f32 %v69, %v70
    %v72 = vrot.slane %v71, 1
    %v73 = vadd.f32 %v71, %v72
    %v74 = vrot.slane %v67, 4
    %v75 = vadd.f32 %v67, %v74
    %v76 = vrot.slane %v75, 2
    %v77 = vadd.f32 %v75, %v76
    %v78 = vrot.slane %v77, 1
    %v79 = vadd.f32 %v77, %v78
    %vm82 = vcmask 1041409
    %v83 = vsel %vm82, %v79, %v73
    %v85 = vadd.f32 %v65, %v83
    %86 = vst [vmem:[#allocation7] sm:$0x3] %v85
    %v87 = vld [vmem:[#allocation8] sm:$0x3]
    %v88 = vadd.f32 %v61, %v63
    %v89 = vadd.f32 %v62, %v64
    %v90 = vrot.slane %v88, 4
    %v91 = vadd.f32 %v88, %v90
    %v92 = vrot.slane %v91, 2
    %v93 = vadd.f32 %v91, %v92
    %v94 = vrot.slane %v93, 1
    %v95 = vadd.f32 %v93, %v94
    %v96 = vrot.slane %v89, 4
    %v97 = vadd.f32 %v89, %v96
    %v98 = vrot.slane %v97, 2
    %v99 = vadd.f32 %v97, %v98
    %v100 = vrot.slane %v99, 1
    %v101 = vadd.f32 %v99, %v100
    %v104 = vsel %vm82, %v101, %v95
    %v106 = vadd.f32 %v87, %v104
    %107 = vst [vmem:[#allocation8] sm:$0x3] %v106
    // Predicated region
    $region22: #{tpu_custom_call.1} parent=1 // pred_check
      _
    $region23: #{tpu_custom_call.1} parent=1 // pred_check_branch
      %109 = sbr.rel (0) target = $region25
    $region24: #{tpu_custom_call.1} parent=1 // pred_region
      %111 = vsyncadd [#allocation4], 0
      %s113 = sshll.u32 [#allocation7], 4
      %s114 = int_to_ptr.vmem [resolvable:$true] %s113
      %s115 = sshll.u32 %s2, 4
      %s116 = int_to_ptr.hbm [resolvable:$true] %s115
      %118 = dma.vmem_to_hbm [thread:$0]  %s114, 32, %s116, [#allocation4]
    $region25: #{tpu_custom_call.1} parent=1 // pred_fallthru
      _
    // Predicated region
    $region26: #{tpu_custom_call.1} parent=1 // pred_check
      _
    $region27: #{tpu_custom_call.1} parent=1 // pred_check_branch
      %120 = sbr.rel (0) target = $region29
    $region28: #{tpu_custom_call.1} parent=1 // pred_region
      %122 = vsyncadd [#allocation9], 0
      %s124 = sshll.u32 [#allocation8], 4
      %s125 = int_to_ptr.vmem [resolvable:$true] %s124
      %s126 = sshll.u32 %s3, 4
      %s127 = int_to_ptr.hbm [resolvable:$true] %s126
      %129 = dma.vmem_to_hbm [thread:$0]  %s125, 32, %s127, [#allocation9]
    $region29: #{tpu_custom_call.1} parent=1 // pred_fallthru
      _
    // Predicated region
    $region30: #{tpu_custom_call.1} parent=1 // pred_check
      _
    $region31: #{tpu_custom_call.1} parent=1 // pred_check_branch
      %131 = sbr.rel (0) target = $region33
    $region32: #{tpu_custom_call.1} parent=1 // pred_region
      %133 = dma.done [#allocation4], 32
    $region33: #{tpu_custom_call.1} parent=1 // pred_fallthru
      _
    // Predicated region
    $region34: #{tpu_custom_call.1} parent=1 // pred_check
      _
    $region35: #{tpu_custom_call.1} parent=1 // pred_check_branch
      %135 = sbr.rel (0) target = $region37
    $region36: #{tpu_custom_call.1} parent=1 // pred_region
      %137 = dma.done [#allocation9], 32
    $region37: #{tpu_custom_call.1} parent=1 // pred_fallthru
      _
    %138 = vsyncpa [#allocation3], 1
    %139 = vsyncpa [#allocation6], 1
    %140 = vsyncpa [#allocation4], 1
    %141 = vsyncpa [#allocation9], 1

</llo_original>
